<compile_context>
chip_gen: v6e
topology: v6e:2x2x1
jax: 0.10.0
libtpu: 0.0.40
codegen_flags: <defaults>
</compile_context>

<pallas_src>
import functools
import math

import jax
import jax.numpy as jnp
from jax.experimental import pallas as pl
from jax.experimental.pallas import tpu as pltpu

INPUT_DIM = 32
HIDDEN_DIM = 256
OUTPUT_DIM = 16
BATCH = 16          # small demo batch -> single grid step
LN_EPS = 1e-5       # PyTorch nn.LayerNorm default

# Lane-dense output slab layout (last dim = 128 -> unmasked vst, one writeback)
_SLAB = 128
_R0, _R1 = 0, INPUT_DIM                  # routed_features      [ 0, 32)
_E0, _E1 = _R1, _R1 + INPUT_DIM          # emergence_patterns   [32, 64)
_P0, _P1 = _E1, _E1 + OUTPUT_DIM         # predictions          [64, 80)
_A0 = _P1                                # meta_awareness       [80] (bcast to 128)

_GELU_C0 = 0.7978845608028654            # sqrt(2/pi)
_GELU_C1 = 0.044715


def _max_tile_b():
    """Generation-aware max rows per grid step.

    128 on v5e (4x128x128 MXU, single vector-store slot -> keep temporaries
    small); 256 on v6e / v7x.  Falls back to 256 if the device kind cannot
    be queried.
    """
    try:
        kind = jax.devices()[0].device_kind.lower()
        if "v5" in kind:
            return 128
    except Exception:  # pragma: no cover - defensive, keeps CPU/interpret runs alive
        pass
    return 256


def _gelu_tanh(x):
    # tanh-form GELU: 0.5*x*(1 + tanh(sqrt(2/pi)*(x + 0.044715*x^3))).
    # ~5 VALU ops + 1 EUP tanh per element vs ~12 VALU ops for the erf
    # polynomial; |error| vs exact-erf GELU ~1e-3 (tolerance accepted).
    x3 = x * x * x
    return 0.5 * x * (1.0 + jnp.tanh(_GELU_C0 * (x + _GELU_C1 * x3)))


def fused_forward_kernel(
    x_ref,
    wq_ref, bq_ref,              # quantum router
    wc_ref, bc_ref,              # meta-consciousness
    w1_ref, b1_ref,              # input_processor Linear (LN1 affine folded out)
    w2f_ref, b2f_ref,            # output Linear with LN1 affine pre-folded in
    g2_ref, be2_ref,             # output LayerNorm affine
    out_ref,                     # (tile_b, 128) packed slab
):
    x = x_ref[...].astype(jnp.float32)

    # --- quantum-inspired routing: amplitude (softmax) gating of the input ---
    logits = jnp.dot(x, wq_ref[...], preferred_element_type=jnp.float32) + bq_ref[...]
    logits = logits - jnp.max(logits, axis=-1, keepdims=True)
    expl = jnp.exp(logits)
    # Exact division: (tile_b, 32) tensor, negligible cost, amplitudes sum to 1.
    amps = expl / jnp.sum(expl, axis=-1, keepdims=True)
    routed = x * amps

    # --- meta-consciousness: emergence patterns gate the routed features ---
    emergence = jnp.tanh(
        jnp.dot(routed, wc_ref[...], preferred_element_type=jnp.float32) + bc_ref[...]
    )
    awareness = jnp.mean(emergence, axis=-1, keepdims=True)   # fused meta_awareness
    enhanced = routed * emergence

    # --- input_processor: Linear(in,256) -> GELU -> LayerNorm(256) (no affine:
    #     gamma/beta folded into w2f/b2f) ---
    h = jnp.dot(enhanced, w1_ref[...], preferred_element_type=jnp.float32) + b1_ref[...]
    h = _gelu_tanh(h)
    mu = jnp.mean(h, axis=-1, keepdims=True)
    hc = h - mu
    var = jnp.mean(hc * hc, axis=-1, keepdims=True)
    hn = hc * jax.lax.rsqrt(var + LN_EPS)

    # --- output_processor: Linear(256,out) -> LayerNorm(out) ---
    o = jnp.dot(hn, w2f_ref[...], preferred_element_type=jnp.float32) + b2f_ref[...]
    omu = jnp.mean(o, axis=-1, keepdims=True)
    oc = o - omu
    ovar = jnp.mean(oc * oc, axis=-1, keepdims=True)
    pred = oc * jax.lax.rsqrt(ovar + LN_EPS) * g2_ref[...] + be2_ref[...]

    # --- single lane-dense (tile_b, 128) store ---
    tb = routed.shape[0]
    out_ref[...] = jnp.concatenate(
        [routed, emergence, pred, jnp.broadcast_to(awareness, (tb, _SLAB - _P1))],
        axis=-1,
    )


def _round_up(n, m):
    return ((n + m - 1) // m) * m


def _choose_tile_b(b, max_tile_b):
    """Rows per grid step.

    Single grid step whenever the whole (8-padded) batch fits in one tile:
    the grid is a sequential loop on v5e/v6e and sub-128-row cross-TC
    sharding on v7x is pure overhead.  When the batch exceeds max_tile_b we
    split into max_tile_b-row steps (each step >= 128 rows by construction).
    """
    b8 = _round_up(max(b, 8), 8)
    if b8 <= max_tile_b:
        return b8
    return max_tile_b


def fold_layernorm_affine(params):
    """Fold LayerNorm(256) affine (g1, be1) into the output Linear (w2, b2).

    norm(h)*g1 + be1 -> @ w2 + b2  ==  norm(h) @ (diag(g1) @ w2) + (be1 @ w2 + b2)
    Exact algebraic rewrite; removes the broadcast mul/add on the (tile_b, 256)
    activation inside the kernel.
    """
    p = dict(params)
    g1 = p.pop("g1").reshape(-1)          # (256,)
    be1 = p.pop("be1").reshape(-1)        # (256,)
    w2 = p.pop("w2")                      # (256, out)
    b2 = p.pop("b2").reshape(-1)          # (out,)
    p["w2f"] = w2 * g1[:, None]
    p["b2f"] = (b2 + be1 @ w2).reshape(1, OUTPUT_DIM)
    return p


def advanced_network_forward(x, params):
    B, D = x.shape
    assert D == INPUT_DIM
    max_tile_b = _max_tile_b()
    tile_b = _choose_tile_b(B, max_tile_b)
    b_pad = _round_up(B, tile_b)
    if b_pad != B:
        x = jnp.pad(x, ((0, b_pad - B), (0, 0)))
    grid = (b_pad // tile_b,)

    def row_map(i):
        return (i, 0)

    def full_map(i):
        return (0, 0)

    weight_args = (
        params["wq"], params["bq"],
        params["wc"], params["bc"],
        params["w1"], params["b1"],
        params["w2f"], params["b2f"],
        params["g2"], params["be2"],
    )
    weight_specs = [pl.BlockSpec(w.shape, full_map) for w in weight_args]

    slab = pl.pallas_call(
        fused_forward_kernel,
        out_shape=jax.ShapeDtypeStruct((b_pad, _SLAB), jnp.float32),
        grid=grid,
        in_specs=[pl.BlockSpec((tile_b, INPUT_DIM), row_map)] + weight_specs,
        out_specs=pl.BlockSpec((tile_b, _SLAB), row_map),
        compiler_params=pltpu.CompilerParams(
            dimension_semantics=("parallel",),
        ),
    )(x, *weight_args)

    slab = slab[:B]
    routed = slab[:, _R0:_R1]
    emergence = slab[:, _E0:_E1]
    preds = slab[:, _P0:_P1]
    awareness = slab[:, _A0:_A0 + 1]

    conscious_states = {
        "emergence_patterns": emergence,
        "meta_awareness": awareness,
    }
    quantum_states = {"routed_features": routed}
    return {
        "predictions": preds,
        "architecture": {"num_layers": 4, "hidden_dim": 256, "learning_rate": 0.001},
        "quantum_states": quantum_states,
        "conscious_states": conscious_states,
    }


def init_params(key):
    ks = jax.random.split(key, 8)

    def lin(k, fan_in, fan_out):
        bound = 1.0 / math.sqrt(fan_in)
        return jax.random.uniform(k, (fan_in, fan_out), jnp.float32, -bound, bound)

    params = {
        "wq": lin(ks[0], INPUT_DIM, INPUT_DIM),
        "bq": jnp.zeros((1, INPUT_DIM), jnp.float32),
        "wc": lin(ks[1], INPUT_DIM, INPUT_DIM),
        "bc": jnp.zeros((1, INPUT_DIM), jnp.float32),
        "w1": lin(ks[2], INPUT_DIM, HIDDEN_DIM),
        "b1": jax.random.uniform(ks[3], (1, HIDDEN_DIM), jnp.float32,
                                 -1.0 / math.sqrt(INPUT_DIM), 1.0 / math.sqrt(INPUT_DIM)),
        "g1": jnp.ones((HIDDEN_DIM,), jnp.float32),     # LayerNorm(256) weight
        "be1": jnp.zeros((HIDDEN_DIM,), jnp.float32),   # LayerNorm(256) bias
        "w2": lin(ks[4], HIDDEN_DIM, OUTPUT_DIM),
        "b2": jax.random.uniform(ks[5], (1, OUTPUT_DIM), jnp.float32,
                                 -1.0 / math.sqrt(HIDDEN_DIM), 1.0 / math.sqrt(HIDDEN_DIM)),
        "g2": jnp.ones((1, OUTPUT_DIM), jnp.float32),   # LayerNorm(out) weight
        "be2": jnp.zeros((1, OUTPUT_DIM), jnp.float32), # LayerNorm(out) bias
    }
    return params


if __name__ == "__main__":
    key = jax.random.PRNGKey(0)
    k_x, k_p = jax.random.split(key)
    x = jax.random.normal(k_x, (BATCH, INPUT_DIM), jnp.float32)
    params = fold_layernorm_affine(init_params(k_p))

    fwd = jax.jit(functools.partial(advanced_network_forward, params=params))
    out = fwd(x)
    jax.block_until_ready(out["predictions"])

    assert out["predictions"].shape == (BATCH, OUTPUT_DIM)
    assert out["quantum_states"]["routed_features"].shape == (BATCH, INPUT_DIM)
    assert out["conscious_states"]["emergence_patterns"].shape == (BATCH, INPUT_DIM)
    assert out["conscious_states"]["meta_awareness"].shape == (BATCH, 1)
    assert bool(jnp.all(jnp.isfinite(out["predictions"])))
    print("KERNEL_OK")
</pallas_src>

<mosaic_0001>
module attributes {stable_mosaic.version = 11 : i64} {
  func.func @fused_forward_kernel(%arg0: i32, %arg1: memref<16x32xf32, #tpu.memory_space<vmem>>, %arg2: memref<32x32xf32, #tpu.memory_space<vmem>>, %arg3: memref<1x32xf32, #tpu.memory_space<vmem>>, %arg4: memref<32x32xf32, #tpu.memory_space<vmem>>, %arg5: memref<1x32xf32, #tpu.memory_space<vmem>>, %arg6: memref<32x256xf32, #tpu.memory_space<vmem>>, %arg7: memref<1x256xf32, #tpu.memory_space<vmem>>, %arg8: memref<256x16xf32, #tpu.memory_space<vmem>>, %arg9: memref<1x16xf32, #tpu.memory_space<vmem>>, %arg10: memref<1x16xf32, #tpu.memory_space<vmem>>, %arg11: memref<1x16xf32, #tpu.memory_space<vmem>>, %arg12: memref<16x128xf32, #tpu.memory_space<vmem>>) attributes {dimension_semantics = [#tpu.dimension_semantics<parallel>], iteration_bounds = array<i64: 1>, scalar_prefetch = 0 : i64, scratch_operands = 0 : i64, tpu.core_type = #tpu.core_type<tc>, window_params = [{transform_indices = @transform_0, window_bounds = array<i64: 16, 32>}, {pipeline_mode = #tpu.pipeline_mode<synchronous>, transform_indices = @transform_1, window_bounds = array<i64: 32, 32>}, {pipeline_mode = #tpu.pipeline_mode<synchronous>, transform_indices = @transform_2, window_bounds = array<i64: 1, 32>}, {pipeline_mode = #tpu.pipeline_mode<synchronous>, transform_indices = @transform_3, window_bounds = array<i64: 32, 32>}, {pipeline_mode = #tpu.pipeline_mode<synchronous>, transform_indices = @transform_4, window_bounds = array<i64: 1, 32>}, {pipeline_mode = #tpu.pipeline_mode<synchronous>, transform_indices = @transform_5, window_bounds = array<i64: 32, 256>}, {pipeline_mode = #tpu.pipeline_mode<synchronous>, transform_indices = @transform_6, window_bounds = array<i64: 1, 256>}, {pipeline_mode = #tpu.pipeline_mode<synchronous>, transform_indices = @transform_7, window_bounds = array<i64: 256, 16>}, {pipeline_mode = #tpu.pipeline_mode<synchronous>, transform_indices = @transform_8, window_bounds = array<i64: 1, 16>}, {pipeline_mode = #tpu.pipeline_mode<synchronous>, transform_indices = @transform_9, window_bounds = array<i64: 1, 16>}, {pipeline_mode = #tpu.pipeline_mode<synchronous>, transform_indices = @transform_10, window_bounds = array<i64: 1, 16>}, {transform_indices = @transform_11, window_bounds = array<i64: 16, 128>}]} {
    %c0 = arith.constant 0 : index
    %c0_0 = arith.constant 0 : index
    %0 = vector.load %arg1[%c0, %c0_0] : memref<16x32xf32, #tpu.memory_space<vmem>>, vector<16x32xf32>
    %c0_1 = arith.constant 0 : index
    %c0_2 = arith.constant 0 : index
    %1 = vector.load %arg2[%c0_1, %c0_2] : memref<32x32xf32, #tpu.memory_space<vmem>>, vector<32x32xf32>
    %cst = arith.constant dense<0.000000e+00> : vector<16x32xf32>
    %2 = tpu.matmul %0, %1, %cst {dimension_numbers = #tpu.dot_dimension_numbers<[1], [0], [0], [1], [0, 0, 1, 1], [], []>} : vector<16x32xf32>, vector<32x32xf32>, vector<16x32xf32> -> vector<16x32xf32>
    %c0_3 = arith.constant 0 : index
    %c0_4 = arith.constant 0 : index
    %3 = vector.load %arg3[%c0_3, %c0_4] : memref<1x32xf32, #tpu.memory_space<vmem>>, vector<1x32xf32>
    %4 = vector.broadcast %3 : vector<1x32xf32> to vector<16x32xf32>
    %5 = arith.addf %2, %4 : vector<16x32xf32>
    %cst_5 = arith.constant dense<0xFF800000> : vector<16xf32>
    %6 = vector.multi_reduction <maximumf>, %5, %cst_5 [1] : vector<16x32xf32> to vector<16xf32>
    %7 = vector.shape_cast %6 : vector<16xf32> to vector<16x1xf32>
    %8 = vector.broadcast %7 : vector<16x1xf32> to vector<16x32xf32>
    %9 = arith.subf %5, %8 : vector<16x32xf32>
    %10 = math.exp %9 : vector<16x32xf32>
    %cst_6 = arith.constant dense<0.000000e+00> : vector<16xf32>
    %11 = vector.multi_reduction <add>, %10, %cst_6 [1] : vector<16x32xf32> to vector<16xf32>
    %12 = vector.shape_cast %11 : vector<16xf32> to vector<16x1xf32>
    %13 = vector.broadcast %12 : vector<16x1xf32> to vector<16x32xf32>
    %14 = arith.divf %10, %13 : vector<16x32xf32>
    %15 = arith.mulf %0, %14 : vector<16x32xf32>
    %c0_7 = arith.constant 0 : index
    %c0_8 = arith.constant 0 : index
    %16 = vector.load %arg4[%c0_7, %c0_8] : memref<32x32xf32, #tpu.memory_space<vmem>>, vector<32x32xf32>
    %cst_9 = arith.constant dense<0.000000e+00> : vector<16x32xf32>
    %17 = tpu.matmul %15, %16, %cst_9 {dimension_numbers = #tpu.dot_dimension_numbers<[1], [0], [0], [1], [0, 0, 1, 1], [], []>} : vector<16x32xf32>, vector<32x32xf32>, vector<16x32xf32> -> vector<16x32xf32>
    %c0_10 = arith.constant 0 : index
    %c0_11 = arith.constant 0 : index
    %18 = vector.load %arg5[%c0_10, %c0_11] : memref<1x32xf32, #tpu.memory_space<vmem>>, vector<1x32xf32>
    %19 = vector.broadcast %18 : vector<1x32xf32> to vector<16x32xf32>
    %20 = arith.addf %17, %19 : vector<16x32xf32>
    %21 = math.tanh %20 : vector<16x32xf32>
    %cst_12 = arith.constant dense<0.000000e+00> : vector<16xf32>
    %22 = vector.multi_reduction <add>, %21, %cst_12 [1] : vector<16x32xf32> to vector<16xf32>
    %23 = vector.shape_cast %22 : vector<16xf32> to vector<16x1xf32>
    %cst_13 = arith.constant 3.200000e+01 : f32
    %24 = vector.broadcast %cst_13 : f32 to vector<16x1xf32>
    %25 = arith.divf %23, %24 : vector<16x1xf32>
    %26 = arith.mulf %15, %21 : vector<16x32xf32>
    %c0_14 = arith.constant 0 : index
    %c0_15 = arith.constant 0 : index
    %27 = vector.load %arg6[%c0_14, %c0_15] : memref<32x256xf32, #tpu.memory_space<vmem>>, vector<32x256xf32>
    %cst_16 = arith.constant dense<0.000000e+00> : vector<16x256xf32>
    %28 = tpu.matmul %26, %27, %cst_16 {dimension_numbers = #tpu.dot_dimension_numbers<[1], [0], [0], [1], [0, 0, 1, 1], [], []>} : vector<16x32xf32>, vector<32x256xf32>, vector<16x256xf32> -> vector<16x256xf32>
    %c0_17 = arith.constant 0 : index
    %c0_18 = arith.constant 0 : index
    %29 = vector.load %arg7[%c0_17, %c0_18] : memref<1x256xf32, #tpu.memory_space<vmem>>, vector<1x256xf32>
    %30 = vector.broadcast %29 : vector<1x256xf32> to vector<16x256xf32>
    %31 = arith.addf %28, %30 : vector<16x256xf32>
    %32 = arith.mulf %31, %31 : vector<16x256xf32>
    %33 = arith.mulf %32, %31 : vector<16x256xf32>
    %cst_19 = arith.constant 5.000000e-01 : f32
    %34 = vector.broadcast %cst_19 : f32 to vector<16x256xf32>
    %35 = arith.mulf %34, %31 : vector<16x256xf32>
    %cst_20 = arith.constant 4.471500e-02 : f32
    %36 = vector.broadcast %cst_20 : f32 to vector<16x256xf32>
    %37 = arith.mulf %36, %33 : vector<16x256xf32>
    %38 = arith.addf %31, %37 : vector<16x256xf32>
    %cst_21 = arith.constant 0.797884583 : f32
    %39 = vector.broadcast %cst_21 : f32 to vector<16x256xf32>
    %40 = arith.mulf %39, %38 : vector<16x256xf32>
    %41 = math.tanh %40 : vector<16x256xf32>
    %cst_22 = arith.constant 1.000000e+00 : f32
    %42 = vector.broadcast %cst_22 : f32 to vector<16x256xf32>
    %43 = arith.addf %42, %41 : vector<16x256xf32>
    %44 = arith.mulf %35, %43 : vector<16x256xf32>
    %cst_23 = arith.constant dense<0.000000e+00> : vector<16xf32>
    %45 = vector.multi_reduction <add>, %44, %cst_23 [1] : vector<16x256xf32> to vector<16xf32>
    %46 = vector.shape_cast %45 : vector<16xf32> to vector<16x1xf32>
    %cst_24 = arith.constant 2.560000e+02 : f32
    %47 = vector.broadcast %cst_24 : f32 to vector<16x1xf32>
    %48 = arith.divf %46, %47 : vector<16x1xf32>
    %49 = vector.broadcast %48 : vector<16x1xf32> to vector<16x256xf32>
    %50 = arith.subf %44, %49 : vector<16x256xf32>
    %51 = arith.mulf %50, %50 : vector<16x256xf32>
    %cst_25 = arith.constant dense<0.000000e+00> : vector<16xf32>
    %52 = vector.multi_reduction <add>, %51, %cst_25 [1] : vector<16x256xf32> to vector<16xf32>
    %53 = vector.shape_cast %52 : vector<16xf32> to vector<16x1xf32>
    %cst_26 = arith.constant 2.560000e+02 : f32
    %54 = vector.broadcast %cst_26 : f32 to vector<16x1xf32>
    %55 = arith.divf %53, %54 : vector<16x1xf32>
    %cst_27 = arith.constant 9.99999974E-6 : f32
    %56 = vector.broadcast %cst_27 : f32 to vector<16x1xf32>
    %57 = arith.addf %55, %56 : vector<16x1xf32>
    %58 = math.rsqrt %57 : vector<16x1xf32>
    %59 = vector.broadcast %58 : vector<16x1xf32> to vector<16x256xf32>
    %60 = arith.mulf %50, %59 : vector<16x256xf32>
    %c0_28 = arith.constant 0 : index
    %c0_29 = arith.constant 0 : index
    %61 = vector.load %arg8[%c0_28, %c0_29] : memref<256x16xf32, #tpu.memory_space<vmem>>, vector<256x16xf32>
    %cst_30 = arith.constant dense<0.000000e+00> : vector<16x16xf32>
    %62 = tpu.matmul %60, %61, %cst_30 {dimension_numbers = #tpu.dot_dimension_numbers<[1], [0], [0], [1], [0, 0, 1, 1], [], []>} : vector<16x256xf32>, vector<256x16xf32>, vector<16x16xf32> -> vector<16x16xf32>
    %c0_31 = arith.constant 0 : index
    %c0_32 = arith.constant 0 : index
    %63 = vector.load %arg9[%c0_31, %c0_32] : memref<1x16xf32, #tpu.memory_space<vmem>>, vector<1x16xf32>
    %64 = vector.broadcast %63 : vector<1x16xf32> to vector<16x16xf32>
    %65 = arith.addf %62, %64 : vector<16x16xf32>
    %cst_33 = arith.constant dense<0.000000e+00> : vector<16xf32>
    %66 = vector.multi_reduction <add>, %65, %cst_33 [1] : vector<16x16xf32> to vector<16xf32>
    %67 = vector.shape_cast %66 : vector<16xf32> to vector<16x1xf32>
    %cst_34 = arith.constant 1.600000e+01 : f32
    %68 = vector.broadcast %cst_34 : f32 to vector<16x1xf32>
    %69 = arith.divf %67, %68 : vector<16x1xf32>
    %70 = vector.broadcast %69 : vector<16x1xf32> to vector<16x16xf32>
    %71 = arith.subf %65, %70 : vector<16x16xf32>
    %72 = arith.mulf %71, %71 : vector<16x16xf32>
    %cst_35 = arith.constant dense<0.000000e+00> : vector<16xf32>
    %73 = vector.multi_reduction <add>, %72, %cst_35 [1] : vector<16x16xf32> to vector<16xf32>
    %74 = vector.shape_cast %73 : vector<16xf32> to vector<16x1xf32>
    %cst_36 = arith.constant 1.600000e+01 : f32
    %75 = vector.broadcast %cst_36 : f32 to vector<16x1xf32>
    %76 = arith.divf %74, %75 : vector<16x1xf32>
    %cst_37 = arith.constant 9.99999974E-6 : f32
    %77 = vector.broadcast %cst_37 : f32 to vector<16x1xf32>
    %78 = arith.addf %76, %77 : vector<16x1xf32>
    %79 = math.rsqrt %78 : vector<16x1xf32>
    %80 = vector.broadcast %79 : vector<16x1xf32> to vector<16x16xf32>
    %81 = arith.mulf %71, %80 : vector<16x16xf32>
    %c0_38 = arith.constant 0 : index
    %c0_39 = arith.constant 0 : index
    %82 = vector.load %arg10[%c0_38, %c0_39] : memref<1x16xf32, #tpu.memory_space<vmem>>, vector<1x16xf32>
    %83 = vector.broadcast %82 : vector<1x16xf32> to vector<16x16xf32>
    %84 = arith.mulf %81, %83 : vector<16x16xf32>
    %c0_40 = arith.constant 0 : index
    %c0_41 = arith.constant 0 : index
    %85 = vector.load %arg11[%c0_40, %c0_41] : memref<1x16xf32, #tpu.memory_space<vmem>>, vector<1x16xf32>
    %86 = vector.broadcast %85 : vector<1x16xf32> to vector<16x16xf32>
    %87 = arith.addf %84, %86 : vector<16x16xf32>
    %88 = vector.shape_cast %25 : vector<16x1xf32> to vector<16x1xf32>
    %89 = vector.broadcast %88 : vector<16x1xf32> to vector<16x48xf32>
    %90 = tpu.concatenate %15, %21, %87, %89 in 1 : vector<16x32xf32>, vector<16x32xf32>, vector<16x16xf32>, vector<16x48xf32> -> vector<16x128xf32>
    %c0_42 = arith.constant 0 : index
    %c0_43 = arith.constant 0 : index
    %91 = vector.load %arg12[%c0_42, %c0_43] : memref<16x128xf32, #tpu.memory_space<vmem>>, vector<16x128xf32>
    tpu.vector_store %arg12[%c0_42, %c0_43], %90 {strides = array<i32>} : memref<16x128xf32, #tpu.memory_space<vmem>>, vector<16x128xf32>,
    return
  }
  func.func @transform_0(%arg0: i32) -> (i32, i32) {
    %c0_i32 = arith.constant 0 : i32
    %c0_i32_0 = arith.constant 0 : i32
    return %arg0, %c0_i32 : i32, i32
  }
  func.func @transform_1(%arg0: i32) -> (i32, i32) {
    %c0_i32 = arith.constant 0 : i32
    %c0_i32_0 = arith.constant 0 : i32
    %c0_i32_1 = arith.constant 0 : i32
    return %c0_i32, %c0_i32_0 : i32, i32
  }
  func.func @transform_2(%arg0: i32) -> (i32, i32) {
    %c0_i32 = arith.constant 0 : i32
    %c0_i32_0 = arith.constant 0 : i32
    %c0_i32_1 = arith.constant 0 : i32
    return %c0_i32, %c0_i32_0 : i32, i32
  }
  func.func @transform_3(%arg0: i32) -> (i32, i32) {
    %c0_i32 = arith.constant 0 : i32
    %c0_i32_0 = arith.constant 0 : i32
    %c0_i32_1 = arith.constant 0 : i32
    return %c0_i32, %c0_i32_0 : i32, i32
  }
  func.func @transform_4(%arg0: i32) -> (i32, i32) {
    %c0_i32 = arith.constant 0 : i32
    %c0_i32_0 = arith.constant 0 : i32
    %c0_i32_1 = arith.constant 0 : i32
    return %c0_i32, %c0_i32_0 : i32, i32
  }
  func.func @transform_5(%arg0: i32) -> (i32, i32) {
    %c0_i32 = arith.constant 0 : i32
    %c0_i32_0 = arith.constant 0 : i32
    %c0_i32_1 = arith.constant 0 : i32
    return %c0_i32, %c0_i32_0 : i32, i32
  }
  func.func @transform_6(%arg0: i32) -> (i32, i32) {
    %c0_i32 = arith.constant 0 : i32
    %c0_i32_0 = arith.constant 0 : i32
    %c0_i32_1 = arith.constant 0 : i32
    return %c0_i32, %c0_i32_0 : i32, i32
  }
  func.func @transform_7(%arg0: i32) -> (i32, i32) {
    %c0_i32 = arith.constant 0 : i32
    %c0_i32_0 = arith.constant 0 : i32
    %c0_i32_1 = arith.constant 0 : i32
    return %c0_i32, %c0_i32_0 : i32, i32
  }
  func.func @transform_8(%arg0: i32) -> (i32, i32) {
    %c0_i32 = arith.constant 0 : i32
    %c0_i32_0 = arith.constant 0 : i32
    %c0_i32_1 = arith.constant 0 : i32
    return %c0_i32, %c0_i32_0 : i32, i32
  }
  func.func @transform_9(%arg0: i32) -> (i32, i32) {
    %c0_i32 = arith.constant 0 : i32
    %c0_i32_0 = arith.constant 0 : i32
    %c0_i32_1 = arith.constant 0 : i32
    return %c0_i32, %c0_i32_0 : i32, i32
  }
  func.func @transform_10(%arg0: i32) -> (i32, i32) {
    %c0_i32 = arith.constant 0 : i32
    %c0_i32_0 = arith.constant 0 : i32
    %c0_i32_1 = arith.constant 0 : i32
    return %c0_i32, %c0_i32_0 : i32, i32
  }
  func.func @transform_11(%arg0: i32) -> (i32, i32) {
    %c0_i32 = arith.constant 0 : i32
    %c0_i32_0 = arith.constant 0 : i32
    return %arg0, %c0_i32 : i32, i32
  }
}

</mosaic_0001>

<llo_original>
// kernel: advanced_network_forward.1
$region0: #{advanced_network_forward.1}
  #allocation0 [shape = 'u32[]', space=smem, size = 0x4, offset = 0x4, fixed_abs, tag = 'smem constant byte address 0x4 - core index']
  #allocation1 [shape = 'u32[144,128]{1,0:T(1,128)}', space=vmem, size = 0x12000, scoped, tag = 'internal scratch']
  %s0 = inlined_call_operand.hbm [shape: f32[16,32], index: 0, kind: input, shape index: {}]
  %s1 = inlined_call_operand.hbm [shape: f32[32,32], index: 1, kind: input, shape index: {}]
  %s2 = inlined_call_operand.vmem [shape: f32[1,32], index: 2, kind: input, shape index: {}, may-alias: {2,4}]
  %s3 = inlined_call_operand.hbm [shape: f32[32,32], index: 3, kind: input, shape index: {}]
  %s4 = inlined_call_operand.vmem [shape: f32[1,32], index: 4, kind: input, shape index: {}, may-alias: {2,4}]
  %s5 = inlined_call_operand.hbm [shape: f32[32,256], index: 5, kind: input, shape index: {}]
  %s6 = inlined_call_operand.vmem [shape: f32[1,256], index: 6, kind: input, shape index: {}]
  %s7 = inlined_call_operand.hbm [shape: f32[256,16], index: 7, kind: input, shape index: {}]
  %s8 = inlined_call_operand.vmem [shape: f32[1,16], index: 8, kind: input, shape index: {}]
  %s9 = inlined_call_operand.vmem [shape: f32[1,16], index: 9, kind: input, shape index: {}]
  %s10 = inlined_call_operand.vmem [shape: f32[1,16], index: 10, kind: input, shape index: {}]
  %s11 = inlined_call_operand.vmem [shape: f32[16,128], index: 11, kind: output, shape index: {}]
  %s12 = sld [smem:[#allocation0]]
  $region74: #{advanced_network_forward.1} parent=0
    _
  %s14 = ssub.s32 1, %s12
  %s15 = scalar_select 0, %s14, %s12
  $region1: #{advanced_network_forward.1} parent=0
    #allocation2 [shape = 'u8[8192]{0}', space=vmem, size = 0x2000, scoped, tag = 'input window, operand 0, single buffered']
    #allocation3 [shape = 's32[1]{0}', space=sflag, size = 0x4, scoped, tag = 'scoped memory for advanced_network_forward.1']
    #allocation4 [shape = 'u8[16384]{0}', space=vmem, size = 0x4000, scoped, tag = 'input window, operand 1, single buffered']
    #allocation5 [shape = 's32[1]{0}', space=sflag, size = 0x4, scoped, tag = 'scoped memory for advanced_network_forward.1']
    #allocation6 [shape = 'u8[16384]{0}', space=vmem, size = 0x4000, scoped, tag = 'input window, operand 3, single buffered']
    #allocation7 [shape = 'u8[32768]{0}', space=vmem, size = 0x8000, scoped, tag = 'input window, operand 5, single buffered']
    #allocation8 [shape = 's32[1]{0}', space=sflag, size = 0x4, scoped, tag = 'scoped memory for advanced_network_forward.1']
    #allocation9 [shape = 'u8[131072]{0}', space=vmem, size = 0x20000, scoped, tag = 'input window, operand 7, single buffered']
    %16 = vsyncpa [#allocation3], 0
    %17 = vsyncpa [#allocation5], 0
    %18 = vsyncpa [#allocation8], 0
    // Predicated region
    $region2: #{advanced_network_forward.1} parent=1 // pred_check
      _
    $region3: #{advanced_network_forward.1} parent=1 // pred_check_branch
      %20 = sbr.rel (0) target = $region5
    $region4: #{advanced_network_forward.1} parent=1 // pred_region
      %s22 = ssub.s32 256, 256
      %23 = vsyncadd [#allocation3], %s22
      %s24 = sshll.u32 [#allocation2], 4
      %s25 = int_to_ptr.vmem [resolvable:$true] %s24
      %30 = dma.hbm_to_vmem [thread:$0]  %s0, 256, %s25, [#allocation3], 128, 128, 8
    $region5: #{advanced_network_forward.1} parent=1 // pred_fallthru
      _
    // Predicated region
    $region6: #{advanced_network_forward.1} parent=1 // pred_check
      _
    $region7: #{advanced_network_forward.1} parent=1 // pred_check_branch
      %32 = sbr.rel (0) target = $region9
    $region8: #{advanced_network_forward.1} parent=1 // pred_region
      %s34 = ssub.s32 512, 512
      %35 = vsyncadd [#allocation5], %s34
      %s36 = sshll.u32 [#allocation4], 4
      %s37 = int_to_ptr.vmem [resolvable:$true] %s36
      %42 = dma.hbm_to_vmem [thread:$0]  %s1, 512, %s37, [#allocation5], 128, 128, 8
    $region9: #{advanced_network_forward.1} parent=1 // pred_fallthru
      _
    // Predicated region
    $region10: #{advanced_network_forward.1} parent=1 // pred_check
      _
    $region11: #{advanced_network_forward.1} parent=1 // pred_check_branch
      %44 = sbr.rel (0) target = $region13
    $region12: #{advanced_network_forward.1} parent=1 // pred_region
      _
    $region13: #{advanced_network_forward.1} parent=1 // pred_fallthru
      _
    // Predicated region
    $region14: #{advanced_network_forward.1} parent=1 // pred_check
      _
    $region15: #{advanced_network_forward.1} parent=1 // pred_check_branch
      %46 = sbr.rel (0) target = $region17
    $region16: #{advanced_network_forward.1} parent=1 // pred_region
      %s48 = ssub.s32 512, 512
      %49 = vsyncadd [#allocation5], %s48
      %s50 = sshll.u32 [#allocation6], 4
      %s51 = int_to_ptr.vmem [resolvable:$true] %s50
      %56 = dma.hbm_to_vmem [thread:$0]  %s3, 512, %s51, [#allocation5], 128, 128, 8
    $region17: #{advanced_network_forward.1} parent=1 // pred_fallthru
      _
    // Predicated region
    $region18: #{advanced_network_forward.1} parent=1 // pred_check
      _
    $region19: #{advanced_network_forward.1} parent=1 // pred_check_branch
      %58 = sbr.rel (0) target = $region21
    $region20: #{advanced_network_forward.1} parent=1 // pred_region
      _
    $region21: #{advanced_network_forward.1} parent=1 // pred_fallthru
      _
    // Predicated region
    $region22: #{advanced_network_forward.1} parent=1 // pred_check
      _
    $region23: #{advanced_network_forward.1} parent=1 // pred_check_branch
      %60 = sbr.rel (0) target = $region25
    $region24: #{advanced_network_forward.1} parent=1 // pred_region
      %s62 = ssub.s32 1024, 1024
      %63 = vsyncadd [#allocation8], %s62
      %s64 = sshll.u32 [#allocation7], 4
      %s65 = int_to_ptr.vmem [resolvable:$true] %s64
      %70 = dma.hbm_to_vmem [thread:$0]  %s5, 1024, %s65, [#allocation8], 256, 256, 16
    $region25: #{advanced_network_forward.1} parent=1 // pred_fallthru
      _
    // Predicated region
    $region26: #{advanced_network_forward.1} parent=1 // pred_check
      _
    $region27: #{advanced_network_forward.1} parent=1 // pred_check_branch
      %72 = sbr.rel (0) target = $region29
    $region28: #{advanced_network_forward.1} parent=1 // pred_region
      _
    $region29: #{advanced_network_forward.1} parent=1 // pred_fallthru
      _
    // Predicated region
    $region30: #{advanced_network_forward.1} parent=1 // pred_check
      _
    $region31: #{advanced_network_forward.1} parent=1 // pred_check_branch
      %74 = sbr.rel (0) target = $region33
    $region32: #{advanced_network_forward.1} parent=1 // pred_region
      %s76 = ssub.s32 4096, 4096
      %77 = vsyncadd [#allocation8], %s76
      %s78 = sshll.u32 [#allocation9], 4
      %s79 = int_to_ptr.vmem [resolvable:$true] %s78
      %84 = dma.hbm_to_vmem [thread:$0]  %s7, 4096, %s79, [#allocation8], 128, 128, 8
    $region33: #{advanced_network_forward.1} parent=1 // pred_fallthru
      _
    // Predicated region
    $region34: #{advanced_network_forward.1} parent=1 // pred_check
      _
    $region35: #{advanced_network_forward.1} parent=1 // pred_check_branch
      %86 = sbr.rel (0) target = $region37
    $region36: #{advanced_network_forward.1} parent=1 // pred_region
      _
    $region37: #{advanced_network_forward.1} parent=1 // pred_fallthru
      _
    // Predicated region
    $region38: #{advanced_network_forward.1} parent=1 // pred_check
      _
    $region39: #{advanced_network_forward.1} parent=1 // pred_check_branch
      %88 = sbr.rel (0) target = $region41
    $region40: #{advanced_network_forward.1} parent=1 // pred_region
      _
    $region41: #{advanced_network_forward.1} parent=1 // pred_fallthru
      _
    // Predicated region
    $region42: #{advanced_network_forward.1} parent=1 // pred_check
      _
    $region43: #{advanced_network_forward.1} parent=1 // pred_check_branch
      %90 = sbr.rel (0) target = $region45
    $region44: #{advanced_network_forward.1} parent=1 // pred_region
      _
    $region45: #{advanced_network_forward.1} parent=1 // pred_fallthru
      _
    // Predicated region
    $region46: #{advanced_network_forward.1} parent=1 // pred_check
      _
    $region47: #{advanced_network_forward.1} parent=1 // pred_check_branch
      %92 = sbr.rel (0) target = $region49
    $region48: #{advanced_network_forward.1} parent=1 // pred_region
      %93 = dma.done [#allocation3], 256
    $region49: #{advanced_network_forward.1} parent=1 // pred_fallthru
      _
    // Predicated region
    $region50: #{advanced_network_forward.1} parent=1 // pred_check
      _
    $region51: #{advanced_network_forward.1} parent=1 // pred_check_branch
      %95 = sbr.rel (0) target = $region53
    $region52: #{advanced_network_forward.1} parent=1 // pred_region
      %96 = dma.done [#allocation5], 512
    $region53: #{advanced_network_forward.1} parent=1 // pred_fallthru
      _
    // Predicated region
    $region54: #{advanced_network_forward.1} parent=1 // pred_check
      _
    $region55: #{advanced_network_forward.1} parent=1 // pred_check_branch
      %98 = sbr.rel (0) target = $region57
    $region56: #{advanced_network_forward.1} parent=1 // pred_region
      %99 = dma.done [#allocation5], 512
    $region57: #{advanced_network_forward.1} parent=1 // pred_fallthru
      _
    // Predicated region
    $region58: #{advanced_network_forward.1} parent=1 // pred_check
      _
    $region59: #{advanced_network_forward.1} parent=1 // pred_check_branch
      %101 = sbr.rel (0) target = $region61
    $region60: #{advanced_network_forward.1} parent=1 // pred_region
      %102 = dma.done [#allocation8], 1024
    $region61: #{advanced_network_forward.1} parent=1 // pred_fallthru
      _
    // Predicated region
    $region62: #{advanced_network_forward.1} parent=1 // pred_check
      _
    $region63: #{advanced_network_forward.1} parent=1 // pred_check_branch
      %104 = sbr.rel (0) target = $region65
    $region64: #{advanced_network_forward.1} parent=1 // pred_region
      %105 = dma.done [#allocation8], 4096
    $region65: #{advanced_network_forward.1} parent=1 // pred_fallthru
      _
    %v106 = vld [vmem:[#allocation2] sm:$0xff]
    %v107 = vld [vmem:[#allocation2 + $0x8] sm:$0xff]
    %v108 = vld [vmem:[#allocation4] sm:$0xff]
    %v109 = vld [vmem:[#allocation4 + $0x8] sm:$0xff]
    %v110 = vld [vmem:[#allocation4 + $0x10] sm:$0xff]
    %v111 = vld [vmem:[#allocation4 + $0x18] sm:$0xff]
    %v112 = vld [vmem:[%s2] sm:$0x1]
    %v114 = vlaneseq
    %v115 = vshrl.u32 %v114, 7
    %v116 = vsub.s32 0, %v115
    %v117 = vrot.slane %v112, %v116
    %vm119 = vcmask 261120
    %v121 = vsel %vm119, %v106, 0
    %v124 = vsel %vm119, %v107, 0
    %126 = vmatprep.subr.mxu0 0.0
    %127 = vmatpush1.msra.mxu0 0.0
    %128 = vmatprep.subr.mxu0 0.0
    %129 = vmatpush1.msra.mxu0 0.0
    %130 = vmatprep.subr.mxu0 0.0
    %131 = vmatpush1.msra.mxu0 0.0
    %132 = vmatprep.subr.mxu0 0.0
    %133 = vmatpush1.msra.mxu0 0.0
    %134 = vmatprep.subr.mxu0 0.0
    %135 = vmatpush1.msra.mxu0 0.0
    %136 = vmatprep.subr.mxu0 0.0
    %137 = vmatpush1.msra.mxu0 0.0
    %138 = vmatprep.subr.mxu0 0.0
    %139 = vmatpush1.msra.mxu0 0.0
    %140 = vmatprep.subr.mxu0 0.0
    %141 = vmatpush1.msra.mxu0 0.0
    %142 = vmatprep.subr.mxu0 0.0
    %143 = vmatpush1.msra.mxu0 0.0
    %144 = vmatprep.subr.mxu0 0.0
    %145 = vmatpush1.msra.mxu0 0.0
    %146 = vmatprep.subr.mxu0 0.0
    %147 = vmatpush1.msra.mxu0 0.0
    %148 = vmatprep.subr.mxu0 0.0
    %149 = vmatpush1.msra.mxu0 0.0
    %150 = vmatprep.subr.mxu0 0.0
    %151 = vmatpush1.msra.mxu0 %v111
    %152 = vmatprep.subr.mxu0 0.0
    %153 = vmatpush1.msra.mxu0 %v110
    %154 = vmatprep.subr.mxu0 0.0
    %155 = vmatpush1.msra.mxu0 %v109
    %156 = vmatprep.subr.mxu0 0.0
    %157 = vmatpush1.msra.mxu0 %v108
    %158 = vmatprep.subr.mxu0 0.0
    %159 = vmatpush2.msra.mxu0 0.0
    %160 = vmatprep.subr.mxu0 0.0
    %161 = vmatpush2.msra.mxu0 0.0
    %162 = vmatprep.subr.mxu0 0.0
    %163 = vmatpush2.msra.mxu0 0.0
    %164 = vmatprep.subr.mxu0 0.0
    %165 = vmatpush2.msra.mxu0 0.0
    %166 = vmatprep.subr.mxu0 0.0
    %167 = vmatpush2.msra.mxu0 0.0
    %168 = vmatprep.subr.mxu0 0.0
    %169 = vmatpush2.msra.mxu0 0.0
    %170 = vmatprep.subr.mxu0 0.0
    %171 = vmatpush2.msra.mxu0 0.0
    %172 = vmatprep.subr.mxu0 0.0
    %173 = vmatpush2.msra.mxu0 0.0
    %174 = vmatprep.subr.mxu0 0.0
    %175 = vmatpush2.msra.mxu0 0.0
    %176 = vmatprep.subr.mxu0 0.0
    %177 = vmatpush2.msra.mxu0 0.0
    %178 = vmatprep.subr.mxu0 0.0
    %179 = vmatpush2.msra.mxu0 0.0
    %180 = vmatprep.subr.mxu0 0.0
    %181 = vmatpush2.msra.mxu0 0.0
    %182 = vmatprep.subr.mxu0 0.0
    %183 = vmatpush2.msra.mxu0 0.0
    %184 = vmatprep.subr.mxu0 0.0
    %185 = vmatpush2.msra.mxu0 0.0
    %186 = vmatprep.subr.mxu0 0.0
    %187 = vmatpush2.msra.mxu0 0.0
    %188 = vmatprep.subr.mxu0 0.0
    %189 = vmatpush2.msra.mxu0 0.0
    %190 = vmatprep.mubr.f32.mxu0 0.0
    %191 = vmatmul.mubr.f32.gmra.mxu0 %v121
    %v192 = vpop.f32.mrf.mxu0
    %v193 = vadd.f32 %v117, %v192
    %v194 = vpop.f32.mrf.mxu0
    %195 = vmatprep.mubr.f32.mxu0 0.0
    %196 = vmatmul.mubr.f32.gmra.mxu0 %v124
    %v197 = vpop.f32.mrf.mxu0
    %v198 = vadd.f32 %v117, %v197
    %v199 = vpop.f32.mrf.mxu0
    %200 = vdwg.mxu0
    %v201 = vsel %vm119, %v193, -inf
    %202 = vmax.xlane.f32.xlu0 %v201
    %v203 = vpop.xlane.xlu0 %202
    %v204 = vsel %vm119, %v198, -inf
    %205 = vmax.xlane.f32.xlu0 %v204
    %v206 = vpop.xlane.xlu0 %205
    %v207 = vsub.f32 %v193, %v203
    %v208 = vsub.f32 %v198, %v206
    %v209 = vmul.f32 %v207, 1.442695
    %v210 = vpow.pop %v209
    %v211 = vmul.f32 %v208, 1.442695
    %v212 = vpow.pop %v211
    %v213 = vsel %vm119, %v210, 0.0
    %214 = vadd.xlane.f32.xlu0 %v213
    %v215 = vpop.xlane.xlu0 %214
    %v216 = vsel %vm119, %v212, 0.0
    %217 = vadd.xlane.f32.xlu0 %v216
    %v218 = vpop.xlane.xlu0 %217
    %v219 = vrcp.pop %v215
    %v220 = vmul.f32 %v210, %v219
    %v221 = vrcp.pop %v218
    %v222 = vmul.f32 %v212, %v221
    %v223 = vmul.f32 %v106, %v220
    %v224 = vmul.f32 %v107, %v222
    %v225 = vld [vmem:[#allocation6] sm:$0xff]
    %v226 = vld [vmem:[#allocation6 + $0x8] sm:$0xff]
    %v227 = vld [vmem:[#allocation6 + $0x10] sm:$0xff]
    %v228 = vld [vmem:[#allocation6 + $0x18] sm:$0xff]
    %v229 = vld [vmem:[%s4] sm:$0x1]
    %v231 = vlaneseq
    %v232 = vshrl.u32 %v231, 7
    %v233 = vsub.s32 0, %v232
    %v234 = vrot.slane %v229, %v233
    %v237 = vsel %vm119, %v223, 0
    %v240 = vsel %vm119, %v224, 0
    %242 = vmatprep.subr.mxu0 0.0
    %243 = vmatpush1.msra.mxu0 0.0
    %244 = vmatprep.subr.mxu0 0.0
    %245 = vmatpush1.msra.mxu0 0.0
    %246 = vmatprep.subr.mxu0 0.0
    %247 = vmatpush1.msra.mxu0 0.0
    %248 = vmatprep.subr.mxu0 0.0
    %249 = vmatpush1.msra.mxu0 0.0
    %250 = vmatprep.subr.mxu0 0.0
    %251 = vmatpush1.msra.mxu0 0.0
    %252 = vmatprep.subr.mxu0 0.0
    %253 = vmatpush1.msra.mxu0 0.0
    %254 = vmatprep.subr.mxu0 0.0
    %255 = vmatpush1.msra.mxu0 0.0
    %256 = vmatprep.subr.mxu0 0.0
    %257 = vmatpush1.msra.mxu0 0.0
    %258 = vmatprep.subr.mxu0 0.0
    %259 = vmatpush1.msra.mxu0 0.0
    %260 = vmatprep.subr.mxu0 0.0
    %261 = vmatpush1.msra.mxu0 0.0
    %262 = vmatprep.subr.mxu0 0.0
    %263 = vmatpush1.msra.mxu0 0.0
    %264 = vmatprep.subr.mxu0 0.0
    %265 = vmatpush1.msra.mxu0 0.0
    %266 = vmatprep.subr.mxu0 0.0
    %267 = vmatpush1.msra.mxu0 %v228
    %268 = vmatprep.subr.mxu0 0.0
    %269 = vmatpush1.msra.mxu0 %v227
    %270 = vmatprep.subr.mxu0 0.0
    %271 = vmatpush1.msra.mxu0 %v226
    %272 = vmatprep.subr.mxu0 0.0
    %273 = vmatpush1.msra.mxu0 %v225
    %274 = vmatprep.subr.mxu0 0.0
    %275 = vmatpush2.msra.mxu0 0.0
    %276 = vmatprep.subr.mxu0 0.0
    %277 = vmatpush2.msra.mxu0 0.0
    %278 = vmatprep.subr.mxu0 0.0
    %279 = vmatpush2.msra.mxu0 0.0
    %280 = vmatprep.subr.mxu0 0.0
    %281 = vmatpush2.msra.mxu0 0.0
    %282 = vmatprep.subr.mxu0 0.0
    %283 = vmatpush2.msra.mxu0 0.0
    %284 = vmatprep.subr.mxu0 0.0
    %285 = vmatpush2.msra.mxu0 0.0
    %286 = vmatprep.subr.mxu0 0.0
    %287 = vmatpush2.msra.mxu0 0.0
    %288 = vmatprep.subr.mxu0 0.0
    %289 = vmatpush2.msra.mxu0 0.0
    %290 = vmatprep.subr.mxu0 0.0
    %291 = vmatpush2.msra.mxu0 0.0
    %292 = vmatprep.subr.mxu0 0.0
    %293 = vmatpush2.msra.mxu0 0.0
    %294 = vmatprep.subr.mxu0 0.0
    %295 = vmatpush2.msra.mxu0 0.0
    %296 = vmatprep.subr.mxu0 0.0
    %297 = vmatpush2.msra.mxu0 0.0
    %298 = vmatprep.subr.mxu0 0.0
    %299 = vmatpush2.msra.mxu0 0.0
    %300 = vmatprep.subr.mxu0 0.0
    %301 = vmatpush2.msra.mxu0 0.0
    %302 = vmatprep.subr.mxu0 0.0
    %303 = vmatpush2.msra.mxu0 0.0
    %304 = vmatprep.subr.mxu0 0.0
    %305 = vmatpush2.msra.mxu0 0.0
    %306 = vmatprep.mubr.f32.mxu0 0.0
    %307 = vmatmul.mubr.f32.gmra.mxu0 %v237
    %v308 = vpop.f32.mrf.mxu0
    %v309 = vadd.f32 %v234, %v308
    %v310 = vpop.f32.mrf.mxu0
    %311 = vmatprep.mubr.f32.mxu0 0.0
    %312 = vmatmul.mubr.f32.gmra.mxu0 %v240
    %v313 = vpop.f32.mrf.mxu0
    %v314 = vadd.f32 %v234, %v313
    %v315 = vpop.f32.mrf.mxu0
    %316 = vdwg.mxu0
    %v317 = vtanh.pop %v309
    %v318 = vtanh.pop %v314
    %v319 = vsel %vm119, %v317, 0.0
    %320 = vadd.xlane.f32.xlu0 %v319
    %v321 = vpop.xlane.xlu0 %320
    %v322 = vsel %vm119, %v318, 0.0
    %323 = vadd.xlane.f32.xlu0 %v322
    %v324 = vpop.xlane.xlu0 %323
    %v325 = vrcp.pop 32.0
    %v326 = vmul.f32 %v321, %v325
    %v327 = vmul.f32 %v324, %v325
    %v328 = vmul.f32 %v223, %v317
    %v329 = vmul.f32 %v224, %v318
    %v330 = vld [vmem:[#allocation7] sm:$0xff]
    %v331 = vld [vmem:[#allocation7 + $0x8] sm:$0xff]
    %v332 = vld [vmem:[#allocation7 + $0x10] sm:$0xff]
    %v333 = vld [vmem:[#allocation7 + $0x18] sm:$0xff]
    %v334 = vld [vmem:[#allocation7 + $0x20] sm:$0xff]
    %v335 = vld [vmem:[#allocation7 + $0x28] sm:$0xff]
    %v336 = vld [vmem:[#allocation7 + $0x30] sm:$0xff]
    %v337 = vld [vmem:[#allocation7 + $0x38] sm:$0xff]
    %v338 = vld [vmem:[%s6] sm:$0x3]
    %v340 = vlaneseq
    %v341 = vshrl.u32 %v340, 7
    %v342 = vsub.s32 0, %v341
    %v343 = vrot.slane %v338, %v342
    %v344 = vlaneseq
    %v345 = vshrl.u32 %v344, 7
    %v346 = vsub.s32 1, %v345
    %v347 = vrot.slane %v338, %v346
    %v351 = vsel %vm119, %v328, 0
    %v354 = vsel %vm119, %v329, 0
    %356 = vmatprep.subr.mxu0 0.0
    %357 = vmatpush1.msra.mxu0 0.0
    %358 = vmatprep.subr.mxu0 0.0
    %359 = vmatpush1.msra.mxu0 0.0
    %360 = vmatprep.subr.mxu0 0.0
    %361 = vmatpush1.msra.mxu0 0.0
    %362 = vmatprep.subr.mxu0 0.0
    %363 = vmatpush1.msra.mxu0 0.0
    %364 = vmatprep.subr.mxu0 0.0
    %365 = vmatpush1.msra.mxu0 0.0
    %366 = vmatprep.subr.mxu0 0.0
    %367 = vmatpush1.msra.mxu0 0.0
    %368 = vmatprep.subr.mxu0 0.0
    %369 = vmatpush1.msra.mxu0 0.0
    %370 = vmatprep.subr.mxu0 0.0
    %371 = vmatpush1.msra.mxu0 0.0
    %372 = vmatprep.subr.mxu0 0.0
    %373 = vmatpush1.msra.mxu0 0.0
    %374 = vmatprep.subr.mxu0 0.0
    %375 = vmatpush1.msra.mxu0 0.0
    %376 = vmatprep.subr.mxu0 0.0
    %377 = vmatpush1.msra.mxu0 0.0
    %378 = vmatprep.subr.mxu0 0.0
    %379 = vmatpush1.msra.mxu0 0.0
    %380 = vmatprep.subr.mxu0 %v337
    %381 = vmatpush1.msra.mxu0 %v336
    %382 = vmatprep.subr.mxu0 %v335
    %383 = vmatpush1.msra.mxu0 %v334
    %384 = vmatprep.subr.mxu0 %v333
    %385 = vmatpush1.msra.mxu0 %v332
    %386 = vmatprep.subr.mxu0 %v331
    %387 = vmatpush1.msra.mxu0 %v330
    %388 = vmatprep.subr.mxu0 0.0
    %389 = vmatpush2.msra.mxu0 0.0
    %390 = vmatprep.subr.mxu0 0.0
    %391 = vmatpush2.msra.mxu0 0.0
    %392 = vmatprep.subr.mxu0 0.0
    %393 = vmatpush2.msra.mxu0 0.0
    %394 = vmatprep.subr.mxu0 0.0
    %395 = vmatpush2.msra.mxu0 0.0
    %396 = vmatprep.subr.mxu0 0.0
    %397 = vmatpush2.msra.mxu0 0.0
    %398 = vmatprep.subr.mxu0 0.0
    %399 = vmatpush2.msra.mxu0 0.0
    %400 = vmatprep.subr.mxu0 0.0
    %401 = vmatpush2.msra.mxu0 0.0
    %402 = vmatprep.subr.mxu0 0.0
    %403 = vmatpush2.msra.mxu0 0.0
    %404 = vmatprep.subr.mxu0 0.0
    %405 = vmatpush2.msra.mxu0 0.0
    %406 = vmatprep.subr.mxu0 0.0
    %407 = vmatpush2.msra.mxu0 0.0
    %408 = vmatprep.subr.mxu0 0.0
    %409 = vmatpush2.msra.mxu0 0.0
    %410 = vmatprep.subr.mxu0 0.0
    %411 = vmatpush2.msra.mxu0 0.0
    %412 = vmatprep.subr.mxu0 0.0
    %413 = vmatpush2.msra.mxu0 0.0
    %414 = vmatprep.subr.mxu0 0.0
    %415 = vmatpush2.msra.mxu0 0.0
    %416 = vmatprep.subr.mxu0 0.0
    %417 = vmatpush2.msra.mxu0 0.0
    %418 = vmatprep.subr.mxu0 0.0
    %419 = vmatpush2.msra.mxu0 0.0
    %420 = vmatprep.mubr.f32.mxu0 0.0
    %421 = vmatmul.mubr.f32.gmra.mxu0 %v351
    %v422 = vpop.f32.mrf.mxu0
    %v423 = vadd.f32 %v343, %v422
    %v424 = vpop.f32.mrf.mxu0
    %v425 = vadd.f32 %v347, %v424
    %426 = vmatprep.mubr.f32.mxu0 0.0
    %427 = vmatmul.mubr.f32.gmra.mxu0 %v354
    %v428 = vpop.f32.mrf.mxu0
    %v429 = vadd.f32 %v343, %v428
    %v430 = vpop.f32.mrf.mxu0
    %v431 = vadd.f32 %v347, %v430
    %432 = vdwg.mxu0
    %v433 = vmul.f32 %v423, %v423
    %v434 = vmul.f32 %v425, %v425
    %v435 = vmul.f32 %v429, %v429
    %v436 = vmul.f32 %v431, %v431
    %v437 = vmul.f32 %v433, %v423
    %v438 = vmul.f32 %v434, %v425
    %v439 = vmul.f32 %v435, %v429
    %v440 = vmul.f32 %v436, %v431
    %v441 = vmul.f32 %v423, 0.5
    %v442 = vmul.f32 %v425, 0.5
    %v443 = vmul.f32 %v429, 0.5
    %v444 = vmul.f32 %v431, 0.5
    %v445 = vmul.f32 %v437, 0.044715
    %v446 = vmul.f32 %v438, 0.044715
    %v447 = vmul.f32 %v439, 0.044715
    %v448 = vmul.f32 %v440, 0.044715
    %v449 = vadd.f32 %v423, %v445
    %v450 = vadd.f32 %v425, %v446
    %v451 = vadd.f32 %v429, %v447
    %v452 = vadd.f32 %v431, %v448
    %v453 = vmul.f32 %v449, 0.7978846
    %v454 = vmul.f32 %v450, 0.7978846
    %v455 = vmul.f32 %v451, 0.7978846
    %v456 = vmul.f32 %v452, 0.7978846
    %v457 = vtanh.pop %v453
    %v458 = vtanh.pop %v454
    %v459 = vtanh.pop %v455
    %v460 = vtanh.pop %v456
    %v461 = vadd.f32 %v457, 1.0
    %v462 = vadd.f32 %v458, 1.0
    %v463 = vadd.f32 %v459, 1.0
    %v464 = vadd.f32 %v460, 1.0
    %v465 = vmul.f32 %v441, %v461
    %v466 = vmul.f32 %v442, %v462
    %v467 = vmul.f32 %v443, %v463
    %v468 = vmul.f32 %v444, %v464
    %v469 = vadd.f32 %v465, %v466
    %470 = vadd.xlane.f32.xlu0 %v469
    %v471 = vpop.xlane.xlu0 %470
    %v472 = vadd.f32 %v467, %v468
    %473 = vadd.xlane.f32.xlu0 %v472
    %v474 = vpop.xlane.xlu0 %473
    %v475 = vrcp.pop 256.0
    %v476 = vmul.f32 %v471, %v475
    %v477 = vmul.f32 %v474, %v475
    %v478 = vsub.f32 %v465, %v476
    %v479 = vsub.f32 %v466, %v476
    %v480 = vsub.f32 %v467, %v477
    %v481 = vsub.f32 %v468, %v477
    %v482 = vmul.f32 %v478, %v478
    %v483 = vmul.f32 %v479, %v479
    %v484 = vmul.f32 %v480, %v480
    %v485 = vmul.f32 %v481, %v481
    %v486 = vadd.f32 %v482, %v483
    %487 = vadd.xlane.f32.xlu0 %v486
    %v488 = vpop.xlane.xlu0 %487
    %v489 = vadd.f32 %v484, %v485
    %490 = vadd.xlane.f32.xlu0 %v489
    %v491 = vpop.xlane.xlu0 %490
    %v492 = vmul.f32 %v488, %v475
    %v493 = vmul.f32 %v491, %v475
    %v494 = vadd.f32 %v492, 1e-05
    %v495 = vadd.f32 %v493, 1e-05
    %v496 = vrsqrt.pop %v494
    %v497 = vrsqrt.pop %v495
    %v498 = vmul.f32 %v478, %v496
    %v499 = vmul.f32 %v479, %v496
    %v500 = vmul.f32 %v480, %v497
    %v501 = vmul.f32 %v481, %v497
    %v502 = vld [vmem:[#allocation9] sm:$0xff]
    %v503 = vld [vmem:[#allocation9 + $0x8] sm:$0xff]
    %v504 = vld [vmem:[#allocation9 + $0x10] sm:$0xff]
    %v505 = vld [vmem:[#allocation9 + $0x18] sm:$0xff]
    %v506 = vld [vmem:[#allocation9 + $0x20] sm:$0xff]
    %v507 = vld [vmem:[#allocation9 + $0x28] sm:$0xff]
    %v508 = vld [vmem:[#allocation9 + $0x30] sm:$0xff]
    %v509 = vld [vmem:[#allocation9 + $0x38] sm:$0xff]
    %v510 = vld [vmem:[#allocation9 + $0x40] sm:$0xff]
    %v511 = vld [vmem:[#allocation9 + $0x48] sm:$0xff]
    %v512 = vld [vmem:[#allocation9 + $0x50] sm:$0xff]
    %v513 = vld [vmem:[#allocation9 + $0x58] sm:$0xff]
    %v514 = vld [vmem:[#allocation9 + $0x60] sm:$0xff]
    %v515 = vld [vmem:[#allocation9 + $0x68] sm:$0xff]
    %v516 = vld [vmem:[#allocation9 + $0x70] sm:$0xff]
    %v517 = vld [vmem:[#allocation9 + $0x78] sm:$0xff]
    %v518 = vld [vmem:[#allocation9 + $0x80] sm:$0xff]
    %v519 = vld [vmem:[#allocation9 + $0x88] sm:$0xff]
    %v520 = vld [vmem:[#allocation9 + $0x90] sm:$0xff]
    %v521 = vld [vmem:[#allocation9 + $0x98] sm:$0xff]
    %v522 = vld [vmem:[#allocation9 + $0xa0] sm:$0xff]
    %v523 = vld [vmem:[#allocation9 + $0xa8] sm:$0xff]
    %v524 = vld [vmem:[#allocation9 + $0xb0] sm:$0xff]
    %v525 = vld [vmem:[#allocation9 + $0xb8] sm:$0xff]
    %v526 = vld [vmem:[#allocation9 + $0xc0] sm:$0xff]
    %v527 = vld [vmem:[#allocation9 + $0xc8] sm:$0xff]
    %v528 = vld [vmem:[#allocation9 + $0xd0] sm:$0xff]
    %v529 = vld [vmem:[#allocation9 + $0xd8] sm:$0xff]
    %v530 = vld [vmem:[#allocation9 + $0xe0] sm:$0xff]
    %v531 = vld [vmem:[#allocation9 + $0xe8] sm:$0xff]
    %v532 = vld [vmem:[#allocation9 + $0xf0] sm:$0xff]
    %v533 = vld [vmem:[#allocation9 + $0xf8] sm:$0xff]
    %v534 = vld [vmem:[%s8] sm:$0x1]
    %v536 = vlaneseq
    %v537 = vshrl.u32 %v536, 7
    %v538 = vsub.s32 0, %v537
    %v539 = vrot.slane %v534, %v538
    %541 = vmatprep.subr.mxu0 0.0
    %542 = vmatpush1.msra.mxu0 %v517
    %543 = vmatprep.subr.mxu0 0.0
    %544 = vmatpush1.msra.mxu0 %v516
    %545 = vmatprep.subr.mxu0 0.0
    %546 = vmatpush1.msra.mxu0 %v515
    %547 = vmatprep.subr.mxu0 0.0
    %548 = vmatpush1.msra.mxu0 %v514
    %549 = vmatprep.subr.mxu0 0.0
    %550 = vmatpush1.msra.mxu0 %v513
    %551 = vmatprep.subr.mxu0 0.0
    %552 = vmatpush1.msra.mxu0 %v512
    %553 = vmatprep.subr.mxu0 0.0
    %554 = vmatpush1.msra.mxu0 %v511
    %555 = vmatprep.subr.mxu0 0.0
    %556 = vmatpush1.msra.mxu0 %v510
    %557 = vmatprep.subr.mxu0 0.0
    %558 = vmatpush1.msra.mxu0 %v509
    %559 = vmatprep.subr.mxu0 0.0
    %560 = vmatpush1.msra.mxu0 %v508
    %561 = vmatprep.subr.mxu0 0.0
    %562 = vmatpush1.msra.mxu0 %v507
    %563 = vmatprep.subr.mxu0 0.0
    %564 = vmatpush1.msra.mxu0 %v506
    %565 = vmatprep.subr.mxu0 0.0
    %566 = vmatpush1.msra.mxu0 %v505
    %567 = vmatprep.subr.mxu0 0.0
    %568 = vmatpush1.msra.mxu0 %v504
    %569 = vmatprep.subr.mxu0 0.0
    %570 = vmatpush1.msra.mxu0 %v503
    %571 = vmatprep.subr.mxu0 0.0
    %572 = vmatpush1.msra.mxu0 %v502
    %573 = vmatprep.subr.mxu0 0.0
    %574 = vmatpush2.msra.mxu0 %v533
    %575 = vmatprep.subr.mxu0 0.0
    %576 = vmatpush2.msra.mxu0 %v532
    %577 = vmatprep.subr.mxu0 0.0
    %578 = vmatpush2.msra.mxu0 %v531
    %579 = vmatprep.subr.mxu0 0.0
    %580 = vmatpush2.msra.mxu0 %v530
    %581 = vmatprep.subr.mxu0 0.0
    %582 = vmatpush2.msra.mxu0 %v529
    %583 = vmatprep.subr.mxu0 0.0
    %584 = vmatpush2.msra.mxu0 %v528
    %585 = vmatprep.subr.mxu0 0.0
    %586 = vmatpush2.msra.mxu0 %v527
    %587 = vmatprep.subr.mxu0 0.0
    %588 = vmatpush2.msra.mxu0 %v526
    %589 = vmatprep.subr.mxu0 0.0
    %590 = vmatpush2.msra.mxu0 %v525
    %591 = vmatprep.subr.mxu0 0.0
    %592 = vmatpush2.msra.mxu0 %v524
    %593 = vmatprep.subr.mxu0 0.0
    %594 = vmatpush2.msra.mxu0 %v523
    %595 = vmatprep.subr.mxu0 0.0
    %596 = vmatpush2.msra.mxu0 %v522
    %597 = vmatprep.subr.mxu0 0.0
    %598 = vmatpush2.msra.mxu0 %v521
    %599 = vmatprep.subr.mxu0 0.0
    %600 = vmatpush2.msra.mxu0 %v520
    %601 = vmatprep.subr.mxu0 0.0
    %602 = vmatpush2.msra.mxu0 %v519
    %603 = vmatprep.subr.mxu0 0.0
    %604 = vmatpush2.msra.mxu0 %v518
    %605 = vmatprep.mubr.f32.mxu0 %v499
    %606 = vmatmul.mubr.f32.gmra.mxu0 %v498
    %v607 = vpop.f32.mrf.mxu0
    %v608 = vadd.f32 %v539, %v607
    %v609 = vpop.f32.mrf.mxu0
    %610 = vmatprep.mubr.f32.mxu0 %v501
    %611 = vmatmul.mubr.f32.gmra.mxu0 %v500
    %v612 = vpop.f32.mrf.mxu0
    %v613 = vadd.f32 %v539, %v612
    %v614 = vpop.f32.mrf.mxu0
    %615 = vdwg.mxu0
    %vm616 = vcmask 130048
    %v617 = vsel %vm616, %v608, 0.0
    %618 = vadd.xlane.f32.xlu0 %v617
    %v619 = vpop.xlane.xlu0 %618
    %v620 = vsel %vm616, %v613, 0.0
    %621 = vadd.xlane.f32.xlu0 %v620
    %v622 = vpop.xlane.xlu0 %621
    %v623 = vrcp.pop 16.0
    %v624 = vmul.f32 %v619, %v623
    %v625 = vmul.f32 %v622, %v623
    %v626 = vsub.f32 %v608, %v624
    %v627 = vsub.f32 %v613, %v625
    %v628 = vmul.f32 %v626, %v626
    %v629 = vmul.f32 %v627, %v627
    %v630 = vsel %vm616, %v628, 0.0
    %631 = vadd.xlane.f32.xlu0 %v630
    %v632 = vpop.xlane.xlu0 %631
    %v633 = vsel %vm616, %v629, 0.0
    %634 = vadd.xlane.f32.xlu0 %v633
    %v635 = vpop.xlane.xlu0 %634
    %v636 = vmul.f32 %v632, %v623
    %v637 = vmul.f32 %v635, %v623
    %v638 = vadd.f32 %v636, 1e-05
    %v639 = vadd.f32 %v637, 1e-05
    %v640 = vrsqrt.pop %v638
    %v641 = vrsqrt.pop %v639
    %v642 = vmul.f32 %v626, %v640
    %v643 = vmul.f32 %v627, %v641
    %v644 = vld [vmem:[%s9] sm:$0x1]
    %v646 = vlaneseq
    %v647 = vshrl.u32 %v646, 7
    %v648 = vsub.s32 0, %v647
    %v649 = vrot.slane %v644, %v648
    %v651 = vmul.f32 %v642, %v649
    %v652 = vmul.f32 %v643, %v649
    %v653 = vld [vmem:[%s10] sm:$0x1]
    %v655 = vlaneseq
    %v656 = vshrl.u32 %v655, 7
    %v657 = vsub.s32 0, %v656
    %v658 = vrot.slane %v653, %v657
    %v660 = vadd.f32 %v651, %v658
    %v661 = vadd.f32 %v652, %v658
    %664 = vrot.lane.b32.xlu0 %v317, 32
    %v665 = vpop.permute.xlu0 %664
    %666 = vrot.lane.b32.xlu0 %v318, 32
    %v667 = vpop.permute.xlu0 %666
    %672 = vrot.lane.b32.xlu0 %v660, 64
    %v673 = vpop.permute.xlu0 %672
    %674 = vrot.lane.b32.xlu0 %v661, 64
    %v675 = vpop.permute.xlu0 %674
    %v678 = vsel %vm119, %v223, %v665
    %v679 = vsel %vm119, %v224, %v667
    %vm680 = vcmask 523264
    %v681 = vsel %vm680, %v678, %v673
    %v682 = vsel %vm680, %v679, %v675
    %vm683 = vcmask 654336
    %v684 = vsel %vm683, %v681, %v326
    %v685 = vsel %vm683, %v682, %v327
    %686 = vst [vmem:[%s11] sm:$0xff] %v684
    %687 = vst [vmem:[%s11 + $0x8] sm:$0xff] %v685
    // Predicated region
    $region66: #{advanced_network_forward.1} parent=1 // pred_check
      _
    $region67: #{advanced_network_forward.1} parent=1 // pred_check_branch
      %689 = sbr.rel (0) target = $region69
    $region68: #{advanced_network_forward.1} parent=1 // pred_region
      _
    $region69: #{advanced_network_forward.1} parent=1 // pred_fallthru
      _
    // Predicated region
    $region70: #{advanced_network_forward.1} parent=1 // pred_check
      _
    $region71: #{advanced_network_forward.1} parent=1 // pred_check_branch
      %691 = sbr.rel (0) target = $region73
    $region72: #{advanced_network_forward.1} parent=1 // pred_region
      _
    $region73: #{advanced_network_forward.1} parent=1 // pred_fallthru
      _
    %692 = vsyncpa [#allocation3], 1
    %693 = vsyncpa [#allocation5], 1
    %694 = vsyncpa [#allocation8], 1

</llo_original>
